<compile_context>
chip_gen: v7x
topology: tpu7x:2x2x1
jax: 0.10.0
libtpu: 0.0.40
codegen_flags: <defaults>
</compile_context>

<pallas_src>
import functools

import jax
import jax.numpy as jnp
from jax.experimental import pallas as pl
from jax.experimental.pallas import tpu as pltpu


def _temporal_attention_kernel(dh_ref, eo_ref, wt_ref, ut_ref, v_ref,
                               ctx_ref, attn_ref, *, s_chunk):
    # dh_ref  : (TB, H)     decoder hidden (batch tile)          f32
    # eo_ref  : (TB, S, H)  encoder outputs (batch tile)         f32
    # wt_ref  : (H, H)      W.weight.T                           f32
    # ut_ref  : (H, H)      U.weight.T                           f32
    # v_ref   : (1, H)      v.weight                             f32
    # ctx_ref : (TB, H)     context output                       f32
    # attn_ref: (TB, S)     attention weights output             f32
    TB, S, H = eo_ref.shape
    n_chunks = S // s_chunk

    # --- projections: bf16 MXU operands, f32 accumulate ---------------------
    wt_bf = wt_ref[...].astype(jnp.bfloat16)
    ut_bf = ut_ref[...].astype(jnp.bfloat16)
    dh_bf = dh_ref[...].astype(jnp.bfloat16)
    hW = jnp.dot(dh_bf, wt_bf, preferred_element_type=jnp.float32)   # (TB, H) f32
    hW_b = hW[:, None, :]                                            # hoisted (TB,1,H)
    v_b = v_ref[...].reshape(1, 1, H)                                # hoisted (1,1,H)

    # --- scores: chunked over S so xU / e never materialize at (TB,S,H) -----
    for c in range(n_chunks):                      # static, small trip-count
        off = c * s_chunk                          # static offset -> static views
        eo_c = eo_ref[:, off:off + s_chunk, :]                       # (TB, sc, H) f32
        xU_c = jnp.dot(
            eo_c.reshape(TB * s_chunk, H).astype(jnp.bfloat16),
            ut_bf, preferred_element_type=jnp.float32,
        ).reshape(TB, s_chunk, H)                                    # MXU, M = TB*sc
        e_c = jnp.tanh(xU_c + hW_b)                                  # EUP, f32
        s_c = jnp.sum(e_c * v_b, axis=-1)                            # (TB, sc) lane reduce
        attn_ref[:, off:off + s_chunk] = s_c       # raw scores into the output block

    # --- softmax over S (max-stabilized, f32, matches torch.softmax) --------
    scores = attn_ref[...]                                           # (TB, S)
    m = jnp.max(scores, axis=-1, keepdims=True)
    p = jnp.exp(scores - m)
    attn = p / jnp.sum(p, axis=-1, keepdims=True)                    # (TB, S)
    attn_ref[...] = attn.astype(attn_ref.dtype)

    # --- context: chunked VPU multiply + cross-sublane reduce (no M=1 MXU) ---
    ctx = jnp.zeros((TB, H), jnp.float32)
    for c in range(n_chunks):
        off = c * s_chunk
        eo_c = eo_ref[:, off:off + s_chunk, :]                       # (TB, sc, H) f32
        a_c = attn[:, off:off + s_chunk]                             # (TB, sc)
        ctx = ctx + jnp.sum(a_c[:, :, None] * eo_c, axis=1)          # (TB, H)
    ctx_ref[...] = ctx.astype(ctx_ref.dtype)


def temporal_attention_forward(decoder_hidden, encoder_outputs, Wt, Ut, v, *,
                               num_batch_blocks=1, s_chunk=32,
                               core_parallel=False):
    """decoder_hidden: (B, H); encoder_outputs: (B, S, H).
    Wt = W.weight.T (H, H), Ut = U.weight.T (H, H), v = v.weight (1, H).

    num_batch_blocks=1 (one grid step) is right for single-TensorCore v5e/v6e.
    On v7x use num_batch_blocks=2, core_parallel=True for a true 2-TC split.
    """
    B, H = decoder_hidden.shape
    _, S, _ = encoder_outputs.shape
    assert B % num_batch_blocks == 0, "batch must divide evenly over batch blocks"
    block_b = B // num_batch_blocks
    # When splitting the batch, the sublane dim of the (block_b, H) blocks must
    # stay a multiple of 8 (or pad B beforehand for odd/small batches).
    assert num_batch_blocks == 1 or block_b % 8 == 0, \
        "batch tile must be a multiple of 8 when the batch grid is split"

    # Largest chunk <= s_chunk that divides S (static -> static ref slices).
    s_chunk = min(s_chunk, S)
    while S % s_chunk:
        s_chunk -= 1

    if num_batch_blocks == 1:
        dim_sem = ("arbitrary",)           # grid of 1: nothing to parallelize
    elif core_parallel:
        dim_sem = (pltpu.CORE_PARALLEL,)   # v7x: guarantee both TCs get a batch shard
    else:
        dim_sem = ("parallel",)

    # Explicit VMEM budget: double-buffered blocks + chunk intermediates + headroom.
    f32 = 4
    block_bytes = (block_b * S * H + block_b * H + 2 * H * H + H
                   + block_b * H + block_b * S) * f32
    chunk_bytes = 3 * block_b * s_chunk * H * f32
    vmem_limit = int(min(max(2 * block_bytes + 2 * chunk_bytes, 8 << 20), 48 << 20))

    cost = pl.CostEstimate(
        flops=2 * B * S * H * H + 2 * B * H * H + 4 * B * S * H,
        transcendentals=B * S * H + B * S,
        bytes_accessed=(B * H + B * S * H + 2 * H * H + H + B * H + B * S) * f32,
    )

    out_shapes = (
        jax.ShapeDtypeStruct((B, H), jnp.float32),   # context
        jax.ShapeDtypeStruct((B, S), jnp.float32),   # attention weights
    )

    kernel = functools.partial(_temporal_attention_kernel, s_chunk=s_chunk)

    return pl.pallas_call(
        kernel,
        out_shape=out_shapes,
        grid_spec=pltpu.PrefetchScalarGridSpec(
            num_scalar_prefetch=0,
            grid=(num_batch_blocks,),
            in_specs=[
                pl.BlockSpec((block_b, H), lambda b: (b, 0)),        # decoder_hidden
                pl.BlockSpec((block_b, S, H), lambda b: (b, 0, 0)),  # encoder_outputs
                pl.BlockSpec((H, H), lambda b: (0, 0)),              # Wt
                pl.BlockSpec((H, H), lambda b: (0, 0)),              # Ut
                pl.BlockSpec((1, H), lambda b: (0, 0)),              # v
            ],
            out_specs=(
                pl.BlockSpec((block_b, H), lambda b: (b, 0)),        # context
                pl.BlockSpec((block_b, S), lambda b: (b, 0)),        # attn
            ),
        ),
        compiler_params=pltpu.CompilerParams(
            dimension_semantics=dim_sem,
            vmem_limit_bytes=vmem_limit,
        ),
        cost_estimate=cost,
    )(decoder_hidden, encoder_outputs, Wt, Ut, v)


def temporal_attention_reference(decoder_hidden, encoder_outputs, Wt, Ut, v):
    """Pure-JAX (f32) reference mirroring the PyTorch forward pass."""
    hW = decoder_hidden @ Wt                                             # (B, H)
    xU = jnp.einsum('bsh,hk->bsk', encoder_outputs, Ut)                  # (B, S, H)
    scores = jnp.sum(jnp.tanh(hW[:, None, :] + xU) * v[None], axis=-1)   # (B, S)
    attn = jax.nn.softmax(scores, axis=1)
    ctx = jnp.einsum('bs,bsh->bh', attn, encoder_outputs)
    return ctx, attn


if __name__ == "__main__":
    # Small shapes; seq_len=64 with the default s_chunk=32 exercises the
    # chunked (multi-chunk) score/context path.
    batch, seq_len, hidden_size = 4, 64, 32

    key = jax.random.PRNGKey(0)
    k_dh, k_eo, k_w, k_u, k_v = jax.random.split(key, 5)
    decoder_hidden = jax.random.normal(k_dh, (batch, hidden_size), jnp.float32)
    encoder_outputs = jax.random.normal(k_eo, (batch, seq_len, hidden_size),
                                        jnp.float32)

    bound = 1.0 / float(hidden_size) ** 0.5
    Wt = jax.random.uniform(k_w, (hidden_size, hidden_size), jnp.float32,
                            -bound, bound)   # = W.weight.T
    Ut = jax.random.uniform(k_u, (hidden_size, hidden_size), jnp.float32,
                            -bound, bound)   # = U.weight.T
    v = jax.random.uniform(k_v, (1, hidden_size), jnp.float32,
                           -bound, bound)    # = v.weight

    ctx, attn = temporal_attention_forward(decoder_hidden, encoder_outputs,
                                           Wt, Ut, v)
    jax.block_until_ready((ctx, attn))

    ref_ctx, ref_attn = temporal_attention_reference(decoder_hidden,
                                                     encoder_outputs, Wt, Ut, v)
    assert ctx.shape == (batch, hidden_size)
    assert attn.shape == (batch, seq_len)
    # bf16 MXU operands in the projection path -> tolerances looser than the
    # previous all-f32 kernel (reference stays pure f32).
    assert jnp.allclose(attn, ref_attn, atol=2e-2, rtol=2e-2)
    assert jnp.allclose(ctx, ref_ctx, atol=5e-2, rtol=5e-2)

    print("KERNEL_OK")
</pallas_src>

<mosaic_0001>
module attributes {stable_mosaic.version = 11 : i64} {
  func.func @_temporal_attention_kernel(%arg0: i32, %arg1: memref<4x32xf32, #tpu.memory_space<vmem>>, %arg2: memref<4x64x32xf32, #tpu.memory_space<vmem>>, %arg3: memref<32x32xf32, #tpu.memory_space<vmem>>, %arg4: memref<32x32xf32, #tpu.memory_space<vmem>>, %arg5: memref<1x32xf32, #tpu.memory_space<vmem>>, %arg6: memref<4x32xf32, #tpu.memory_space<vmem>>, %arg7: memref<4x64xf32, #tpu.memory_space<vmem>>) attributes {dimension_semantics = [#tpu.dimension_semantics<arbitrary>], iteration_bounds = array<i64: 1>, scalar_prefetch = 0 : i64, scratch_operands = 0 : i64, tpu.core_type = #tpu.core_type<tc>, window_params = [{transform_indices = @transform_0, window_bounds = array<i64: 4, 32>}, {transform_indices = @transform_1, window_bounds = array<i64: 4, 64, 32>}, {pipeline_mode = #tpu.pipeline_mode<synchronous>, transform_indices = @transform_2, window_bounds = array<i64: 32, 32>}, {pipeline_mode = #tpu.pipeline_mode<synchronous>, transform_indices = @transform_3, window_bounds = array<i64: 32, 32>}, {pipeline_mode = #tpu.pipeline_mode<synchronous>, transform_indices = @transform_4, window_bounds = array<i64: 1, 32>}, {transform_indices = @transform_5, window_bounds = array<i64: 4, 32>}, {transform_indices = @transform_6, window_bounds = array<i64: 4, 64>}]} {
    %c0 = arith.constant 0 : index
    %c0_0 = arith.constant 0 : index
    %0 = vector.load %arg3[%c0, %c0_0] : memref<32x32xf32, #tpu.memory_space<vmem>>, vector<32x32xf32>
    %1 = arith.truncf %0 : vector<32x32xf32> to vector<32x32xbf16>
    %c0_1 = arith.constant 0 : index
    %c0_2 = arith.constant 0 : index
    %2 = vector.load %arg4[%c0_1, %c0_2] : memref<32x32xf32, #tpu.memory_space<vmem>>, vector<32x32xf32>
    %3 = arith.truncf %2 : vector<32x32xf32> to vector<32x32xbf16>
    %c0_3 = arith.constant 0 : index
    %c0_4 = arith.constant 0 : index
    %4 = vector.load %arg1[%c0_3, %c0_4] : memref<4x32xf32, #tpu.memory_space<vmem>>, vector<4x32xf32>
    %5 = arith.truncf %4 : vector<4x32xf32> to vector<4x32xbf16>
    %cst = arith.constant dense<0.000000e+00> : vector<4x32xf32>
    %6 = tpu.matmul %5, %1, %cst {dimension_numbers = #tpu.dot_dimension_numbers<[1], [0], [0], [1], [0, 0, 1, 1], [], []>} : vector<4x32xbf16>, vector<32x32xbf16>, vector<4x32xf32> -> vector<4x32xf32>
    %7 = vector.shape_cast %6 : vector<4x32xf32> to vector<4x1x32xf32>
    %c0_5 = arith.constant 0 : index
    %c0_6 = arith.constant 0 : index
    %8 = vector.load %arg5[%c0_5, %c0_6] : memref<1x32xf32, #tpu.memory_space<vmem>>, vector<1x32xf32>
    %9 = vector.shape_cast %8 : vector<1x32xf32> to vector<1x1x32xf32>
    %c0_7 = arith.constant 0 : index
    %c0_8 = arith.constant 0 : index
    %c0_9 = arith.constant 0 : index
    %10 = vector.load %arg2[%c0_7, %c0_8, %c0_9] : memref<4x64x32xf32, #tpu.memory_space<vmem>>, vector<4x32x32xf32>
    %11 = vector.shape_cast %10 : vector<4x32x32xf32> to vector<128x32xf32>
    %12 = arith.truncf %11 : vector<128x32xf32> to vector<128x32xbf16>
    %cst_10 = arith.constant dense<0.000000e+00> : vector<128x32xf32>
    %13 = tpu.matmul %12, %3, %cst_10 {dimension_numbers = #tpu.dot_dimension_numbers<[1], [0], [0], [1], [0, 0, 1, 1], [], []>} : vector<128x32xbf16>, vector<32x32xbf16>, vector<128x32xf32> -> vector<128x32xf32>
    %14 = vector.shape_cast %13 : vector<128x32xf32> to vector<4x32x32xf32>
    %15 = vector.broadcast %7 : vector<4x1x32xf32> to vector<4x32x32xf32>
    %16 = arith.addf %14, %15 : vector<4x32x32xf32>
    %17 = math.tanh %16 : vector<4x32x32xf32>
    %18 = vector.broadcast %9 : vector<1x1x32xf32> to vector<4x32x32xf32>
    %19 = arith.mulf %17, %18 : vector<4x32x32xf32>
    %cst_11 = arith.constant dense<0.000000e+00> : vector<4x32xf32>
    %20 = vector.multi_reduction <add>, %19, %cst_11 [2] : vector<4x32x32xf32> to vector<4x32xf32>
    %c0_12 = arith.constant 0 : index
    %c0_13 = arith.constant 0 : index
    %21 = vector.load %arg7[%c0_12, %c0_13] : memref<4x64xf32, #tpu.memory_space<vmem>>, vector<4x32xf32>
    tpu.vector_store %arg7[%c0_12, %c0_13], %20 {strides = array<i32>} : memref<4x64xf32, #tpu.memory_space<vmem>>, vector<4x32xf32>,
    %c0_14 = arith.constant 0 : index
    %c32 = arith.constant 32 : index
    %c0_15 = arith.constant 0 : index
    %22 = vector.load %arg2[%c0_14, %c32, %c0_15] : memref<4x64x32xf32, #tpu.memory_space<vmem>>, vector<4x32x32xf32>
    %23 = vector.shape_cast %22 : vector<4x32x32xf32> to vector<128x32xf32>
    %24 = arith.truncf %23 : vector<128x32xf32> to vector<128x32xbf16>
    %cst_16 = arith.constant dense<0.000000e+00> : vector<128x32xf32>
    %25 = tpu.matmul %24, %3, %cst_16 {dimension_numbers = #tpu.dot_dimension_numbers<[1], [0], [0], [1], [0, 0, 1, 1], [], []>} : vector<128x32xbf16>, vector<32x32xbf16>, vector<128x32xf32> -> vector<128x32xf32>
    %26 = vector.shape_cast %25 : vector<128x32xf32> to vector<4x32x32xf32>
    %27 = vector.broadcast %7 : vector<4x1x32xf32> to vector<4x32x32xf32>
    %28 = arith.addf %26, %27 : vector<4x32x32xf32>
    %29 = math.tanh %28 : vector<4x32x32xf32>
    %30 = vector.broadcast %9 : vector<1x1x32xf32> to vector<4x32x32xf32>
    %31 = arith.mulf %29, %30 : vector<4x32x32xf32>
    %cst_17 = arith.constant dense<0.000000e+00> : vector<4x32xf32>
    %32 = vector.multi_reduction <add>, %31, %cst_17 [2] : vector<4x32x32xf32> to vector<4x32xf32>
    %c0_18 = arith.constant 0 : index
    %c32_19 = arith.constant 32 : index
    %33 = vector.load %arg7[%c0_18, %c32_19] : memref<4x64xf32, #tpu.memory_space<vmem>>, vector<4x32xf32>
    tpu.vector_store %arg7[%c0_18, %c32_19], %32 {strides = array<i32>} : memref<4x64xf32, #tpu.memory_space<vmem>>, vector<4x32xf32>,
    %c0_20 = arith.constant 0 : index
    %c0_21 = arith.constant 0 : index
    %34 = vector.load %arg7[%c0_20, %c0_21] : memref<4x64xf32, #tpu.memory_space<vmem>>, vector<4x64xf32>
    %cst_22 = arith.constant dense<0xFF800000> : vector<4xf32>
    %35 = vector.multi_reduction <maximumf>, %34, %cst_22 [1] : vector<4x64xf32> to vector<4xf32>
    %36 = vector.shape_cast %35 : vector<4xf32> to vector<4x1xf32>
    %37 = vector.broadcast %36 : vector<4x1xf32> to vector<4x64xf32>
    %38 = arith.subf %34, %37 : vector<4x64xf32>
    %39 = math.exp %38 : vector<4x64xf32>
    %cst_23 = arith.constant dense<0.000000e+00> : vector<4xf32>
    %40 = vector.multi_reduction <add>, %39, %cst_23 [1] : vector<4x64xf32> to vector<4xf32>
    %41 = vector.shape_cast %40 : vector<4xf32> to vector<4x1xf32>
    %42 = vector.broadcast %41 : vector<4x1xf32> to vector<4x64xf32>
    %43 = arith.divf %39, %42 : vector<4x64xf32>
    %c0_24 = arith.constant 0 : index
    %c0_25 = arith.constant 0 : index
    %44 = vector.load %arg7[%c0_24, %c0_25] : memref<4x64xf32, #tpu.memory_space<vmem>>, vector<4x64xf32>
    tpu.vector_store %arg7[%c0_24, %c0_25], %43 {strides = array<i32>} : memref<4x64xf32, #tpu.memory_space<vmem>>, vector<4x64xf32>,
    %cst_26 = arith.constant 0.000000e+00 : f32
    %45 = vector.broadcast %cst_26 : f32 to vector<4x32xf32>
    %c0_27 = arith.constant 0 : index
    %c0_28 = arith.constant 0 : index
    %c0_29 = arith.constant 0 : index
    %46 = vector.load %arg2[%c0_27, %c0_28, %c0_29] : memref<4x64x32xf32, #tpu.memory_space<vmem>>, vector<4x32x32xf32>
    %47 = vector.extract_strided_slice %43 {offsets = [0, 0], sizes = [4, 32], strides = [1, 1]} : vector<4x64xf32> to vector<4x32xf32>
    %48 = vector.shape_cast %47 : vector<4x32xf32> to vector<4x32x1xf32>
    %49 = vector.broadcast %48 : vector<4x32x1xf32> to vector<4x32x32xf32>
    %50 = arith.mulf %49, %46 : vector<4x32x32xf32>
    %cst_30 = arith.constant dense<0.000000e+00> : vector<4x32xf32>
    %51 = vector.multi_reduction <add>, %50, %cst_30 [1] : vector<4x32x32xf32> to vector<4x32xf32>
    %52 = arith.addf %45, %51 : vector<4x32xf32>
    %c0_31 = arith.constant 0 : index
    %c32_32 = arith.constant 32 : index
    %c0_33 = arith.constant 0 : index
    %53 = vector.load %arg2[%c0_31, %c32_32, %c0_33] : memref<4x64x32xf32, #tpu.memory_space<vmem>>, vector<4x32x32xf32>
    %54 = vector.extract_strided_slice %43 {offsets = [0, 32], sizes = [4, 32], strides = [1, 1]} : vector<4x64xf32> to vector<4x32xf32>
    %55 = vector.shape_cast %54 : vector<4x32xf32> to vector<4x32x1xf32>
    %56 = vector.broadcast %55 : vector<4x32x1xf32> to vector<4x32x32xf32>
    %57 = arith.mulf %56, %53 : vector<4x32x32xf32>
    %cst_34 = arith.constant dense<0.000000e+00> : vector<4x32xf32>
    %58 = vector.multi_reduction <add>, %57, %cst_34 [1] : vector<4x32x32xf32> to vector<4x32xf32>
    %59 = arith.addf %52, %58 : vector<4x32xf32>
    %c0_35 = arith.constant 0 : index
    %c0_36 = arith.constant 0 : index
    %60 = vector.load %arg6[%c0_35, %c0_36] : memref<4x32xf32, #tpu.memory_space<vmem>>, vector<4x32xf32>
    tpu.vector_store %arg6[%c0_35, %c0_36], %59 {strides = array<i32>} : memref<4x32xf32, #tpu.memory_space<vmem>>, vector<4x32xf32>,
    return
  }
  func.func @transform_0(%arg0: i32) -> (i32, i32) {
    %c0_i32 = arith.constant 0 : i32
    %c0_i32_0 = arith.constant 0 : i32
    return %arg0, %c0_i32 : i32, i32
  }
  func.func @transform_1(%arg0: i32) -> (i32, i32, i32) {
    %c0_i32 = arith.constant 0 : i32
    %c0_i32_0 = arith.constant 0 : i32
    %c0_i32_1 = arith.constant 0 : i32
    return %arg0, %c0_i32, %c0_i32_0 : i32, i32, i32
  }
  func.func @transform_2(%arg0: i32) -> (i32, i32) {
    %c0_i32 = arith.constant 0 : i32
    %c0_i32_0 = arith.constant 0 : i32
    %c0_i32_1 = arith.constant 0 : i32
    return %c0_i32, %c0_i32_0 : i32, i32
  }
  func.func @transform_3(%arg0: i32) -> (i32, i32) {
    %c0_i32 = arith.constant 0 : i32
    %c0_i32_0 = arith.constant 0 : i32
    %c0_i32_1 = arith.constant 0 : i32
    return %c0_i32, %c0_i32_0 : i32, i32
  }
  func.func @transform_4(%arg0: i32) -> (i32, i32) {
    %c0_i32 = arith.constant 0 : i32
    %c0_i32_0 = arith.constant 0 : i32
    %c0_i32_1 = arith.constant 0 : i32
    return %c0_i32, %c0_i32_0 : i32, i32
  }
  func.func @transform_5(%arg0: i32) -> (i32, i32) {
    %c0_i32 = arith.constant 0 : i32
    %c0_i32_0 = arith.constant 0 : i32
    return %arg0, %c0_i32 : i32, i32
  }
  func.func @transform_6(%arg0: i32) -> (i32, i32) {
    %c0_i32 = arith.constant 0 : i32
    %c0_i32_0 = arith.constant 0 : i32
    return %arg0, %c0_i32 : i32, i32
  }
}

</mosaic_0001>

<llo_original>
// kernel: tpu_custom_call.1
$region0: #{tpu_custom_call.1}
  #allocation0 [shape = 'u32[]', space=smem, size = 0x4, offset = 0x4, fixed_abs, tag = 'smem constant byte address 0x4 - core index']
  #allocation1 [shape = 'u32[144,128]{1,0:T(1,128)}', space=vmem, size = 0x12000, scoped, tag = 'internal scratch']
  %s0 = inlined_call_operand.vmem [shape: f32[4,32], index: 0, kind: input, shape index: {}]
  %s1 = inlined_call_operand.vmem [shape: f32[4,64,32], index: 1, kind: input, shape index: {}]
  %s2 = inlined_call_operand.vmem [shape: f32[32,32], index: 2, kind: input, shape index: {}]
  %s3 = inlined_call_operand.vmem [shape: f32[32,32], index: 3, kind: input, shape index: {}]
  %s4 = inlined_call_operand.vmem [shape: f32[1,32], index: 4, kind: input, shape index: {}]
  %s5 = inlined_call_operand.hbm [shape: f32[4,32], index: 5, kind: output, shape index: {0}]
  %s6 = inlined_call_operand.hbm [shape: f32[4,64], index: 6, kind: output, shape index: {1}]
  %7 = xla_tuple %s5, %s6
  %s8 = sld [smem:[#allocation0]]
  $region38: #{tpu_custom_call.1} parent=0
    _
  %s10 = ssub.s32 1, %s8
  %s11 = scalar_select 0, %s10, %s8
  $region1: #{tpu_custom_call.1} parent=0
    #allocation2 [shape = 'u8[2048]{0}', space=vmem, size = 0x800, scoped, tag = 'output window, operand 0, single buffered']
    #allocation3 [shape = 's32[1]{0}', space=sflag, size = 0x4, scoped, tag = 'scoped memory for tpu_custom_call.1']
    #allocation4 [shape = 'u8[2048]{0}', space=vmem, size = 0x800, scoped, tag = 'output window, operand 1, single buffered']
    #allocation5 [shape = 's32[1]{0}', space=sflag, size = 0x4, scoped, tag = 'scoped memory for tpu_custom_call.1']
    %12 = vsyncpa [#allocation3], 0
    %13 = vsyncpa [#allocation5], 0
    // Predicated region
    $region2: #{tpu_custom_call.1} parent=1 // pred_check
      _
    $region3: #{tpu_custom_call.1} parent=1 // pred_check_branch
      %15 = sbr.rel (0) target = $region5
    $region4: #{tpu_custom_call.1} parent=1 // pred_region
      _
    $region5: #{tpu_custom_call.1} parent=1 // pred_fallthru
      _
    // Predicated region
    $region6: #{tpu_custom_call.1} parent=1 // pred_check
      _
    $region7: #{tpu_custom_call.1} parent=1 // pred_check_branch
      %17 = sbr.rel (0) target = $region9
    $region8: #{tpu_custom_call.1} parent=1 // pred_region
      _
    $region9: #{tpu_custom_call.1} parent=1 // pred_fallthru
      _
    // Predicated region
    $region10: #{tpu_custom_call.1} parent=1 // pred_check
      _
    $region11: #{tpu_custom_call.1} parent=1 // pred_check_branch
      %19 = sbr.rel (0) target = $region13
    $region12: #{tpu_custom_call.1} parent=1 // pred_region
      _
    $region13: #{tpu_custom_call.1} parent=1 // pred_fallthru
      _
    // Predicated region
    $region14: #{tpu_custom_call.1} parent=1 // pred_check
      _
    $region15: #{tpu_custom_call.1} parent=1 // pred_check_branch
      %21 = sbr.rel (0) target = $region17
    $region16: #{tpu_custom_call.1} parent=1 // pred_region
      _
    $region17: #{tpu_custom_call.1} parent=1 // pred_fallthru
      _
    // Predicated region
    $region18: #{tpu_custom_call.1} parent=1 // pred_check
      _
    $region19: #{tpu_custom_call.1} parent=1 // pred_check_branch
      %23 = sbr.rel (0) target = $region21
    $region20: #{tpu_custom_call.1} parent=1 // pred_region
      _
    $region21: #{tpu_custom_call.1} parent=1 // pred_fallthru
      _
    %v25 = vld [vmem:[%s2] sm:$0xff]
    %v26 = vld [vmem:[%s2 + $0x8] sm:$0xff]
    %v27 = vld [vmem:[%s2 + $0x10] sm:$0xff]
    %v28 = vld [vmem:[%s2 + $0x18] sm:$0xff]
    %v29 = vpack.c.bf16 %v26, %v25
    %v30 = vpack.c.bf16 %v28, %v27
    %v31 = vld [vmem:[%s3] sm:$0xff]
    %v32 = vld [vmem:[%s3 + $0x8] sm:$0xff]
    %v33 = vld [vmem:[%s3 + $0x10] sm:$0xff]
    %v34 = vld [vmem:[%s3 + $0x18] sm:$0xff]
    %v35 = vpack.c.bf16 %v32, %v31
    %v36 = vpack.c.bf16 %v34, %v33
    %v37 = vld [vmem:[%s0] sm:$0xf]
    %v38 = vpack.c.bf16 %v37, %v37
    %vm39 = vcmask 261120
    %v41 = vsel %vm39, %v38, 0
    %43 = vmatprep.subr.bf16.mxu0 0
    %44 = vmatpush1.bf16.msra.mxu0 %v29
    %45 = vmatprep.subr.bf16.mxu0 0
    %46 = vmatpush1.bf16.msra.mxu0 %v30
    %47 = vmatprep.subr.bf16.mxu0 0
    %48 = vmatpush1.bf16.msra.mxu0 0
    %49 = vmatprep.subr.bf16.mxu0 0
    %50 = vmatpush1.bf16.msra.mxu0 0
    %51 = vmatprep.subr.bf16.mxu0 0
    %52 = vmatpush1.bf16.msra.mxu0 0
    %53 = vmatprep.subr.bf16.mxu0 0
    %54 = vmatpush1.bf16.msra.mxu0 0
    %55 = vmatprep.subr.bf16.mxu0 0
    %56 = vmatpush1.bf16.msra.mxu0 0
    %57 = vmatprep.subr.bf16.mxu0 0
    %58 = vmatpush1.bf16.msra.mxu0 0
    %59 = vmatprep.subr.bf16.mxu0 0
    %60 = vmatpush1.bf16.msra.mxu0 0
    %61 = vmatprep.subr.bf16.mxu0 0
    %62 = vmatpush1.bf16.msra.mxu0 0
    %63 = vmatprep.subr.bf16.mxu0 0
    %64 = vmatpush1.bf16.msra.mxu0 0
    %65 = vmatprep.subr.bf16.mxu0 0
    %66 = vmatpush1.bf16.msra.mxu0 0
    %67 = vmatprep.subr.bf16.mxu0 0
    %68 = vmatpush1.bf16.msra.mxu0 0
    %69 = vmatprep.subr.bf16.mxu0 0
    %70 = vmatpush1.bf16.msra.mxu0 0
    %71 = vmatprep.subr.bf16.mxu0 0
    %72 = vmatpush1.bf16.msra.mxu0 0
    %73 = vmatprep.subr.bf16.mxu0 0
    %74 = vmatpush1.bf16.msra.mxu0 0
    %75 = vmatprep.mubr.bf16.mxu0 0
    %76 = vmatmul.mubr.bf16.gmra.mrb[0].mxu0 %v41
    %v77 = vpop.f32.mrb[0].mxu0
    %v78 = vadd.f32 0.0, %v77
    %v79 = vpop.f32.mrb[0].mxu0
    %v80 = vpop.f32.mrb[0].mxu0
    %v81 = vpop.f32.mrb[0].mxu0
    %82 = vdwg.mxu0
    %v85 = vunpack.c.l.s4 1966171168
    %v86 = vunpack.c.0.s8 %v85
    %v87 = vlaneseq
    %v88 = vshrl.u32 %v87, 7
    %v89 = vsub.s32 %v86, %v88
    %v90 = vrot.slane %v78, %v89
    %v91 = vcombine.high %v90, %v90
    %v93 = vunpack.c.l.s4 1966171168
    %v94 = vunpack.c.0.s8 %v93
    %v95 = vlaneseq
    %v96 = vshrl.u32 %v95, 7
    %v97 = vsub.s32 %v94, %v96
    %v98 = vrot.slane %v90, %v97
    %v100 = vunpack.c.l.s4 1966171168
    %v101 = vunpack.c.0.s8 %v100
    %v102 = vlaneseq
    %v103 = vshrl.u32 %v102, 7
    %v104 = vsub.s32 %v101, %v103
    %v105 = vrot.slane %v91, %v104
    %v106 = vcombine.high %v98, %v98
    %v107 = vcombine.high %v105, %v105
    %v108 = vld [vmem:[%s4] sm:$0x1]
    %v109 = vld [vmem:[%s1] sm:$0xff]
    %v110 = vld [vmem:[%s1 + $0x8] sm:$0xff]
    %v111 = vld [vmem:[%s1 + $0x10] sm:$0xff]
    %v112 = vld [vmem:[%s1 + $0x18] sm:$0xff]
    %v113 = vld [vmem:[%s1 + $0x40] sm:$0xff]
    %v114 = vld [vmem:[%s1 + $0x48] sm:$0xff]
    %v115 = vld [vmem:[%s1 + $0x50] sm:$0xff]
    %v116 = vld [vmem:[%s1 + $0x58] sm:$0xff]
    %v117 = vld [vmem:[%s1 + $0x80] sm:$0xff]
    %v118 = vld [vmem:[%s1 + $0x88] sm:$0xff]
    %v119 = vld [vmem:[%s1 + $0x90] sm:$0xff]
    %v120 = vld [vmem:[%s1 + $0x98] sm:$0xff]
    %v121 = vld [vmem:[%s1 + $0xc0] sm:$0xff]
    %v122 = vld [vmem:[%s1 + $0xc8] sm:$0xff]
    %v123 = vld [vmem:[%s1 + $0xd0] sm:$0xff]
    %v124 = vld [vmem:[%s1 + $0xd8] sm:$0xff]
    %v125 = vpack.c.bf16 %v110, %v109
    %v126 = vpack.c.bf16 %v112, %v111
    %v127 = vpack.c.bf16 %v114, %v113
    %v128 = vpack.c.bf16 %v116, %v115
    %v129 = vpack.c.bf16 %v118, %v117
    %v130 = vpack.c.bf16 %v120, %v119
    %v131 = vpack.c.bf16 %v122, %v121
    %v132 = vpack.c.bf16 %v124, %v123
    %v134 = vsel %vm39, %v125, 0
    %v137 = vsel %vm39, %v126, 0
    %v140 = vsel %vm39, %v127, 0
    %v143 = vsel %vm39, %v128, 0
    %v146 = vsel %vm39, %v129, 0
    %v149 = vsel %vm39, %v130, 0
    %v152 = vsel %vm39, %v131, 0
    %v155 = vsel %vm39, %v132, 0
    %157 = vmatprep.subr.bf16.mxu0 0
    %158 = vmatpush1.bf16.msra.mxu0 %v35
    %159 = vmatprep.subr.bf16.mxu0 0
    %160 = vmatpush1.bf16.msra.mxu0 %v36
    %161 = vmatprep.subr.bf16.mxu0 0
    %162 = vmatpush1.bf16.msra.mxu0 0
    %163 = vmatprep.subr.bf16.mxu0 0
    %164 = vmatpush1.bf16.msra.mxu0 0
    %165 = vmatprep.subr.bf16.mxu0 0
    %166 = vmatpush1.bf16.msra.mxu0 0
    %167 = vmatprep.subr.bf16.mxu0 0
    %168 = vmatpush1.bf16.msra.mxu0 0
    %169 = vmatprep.subr.bf16.mxu0 0
    %170 = vmatpush1.bf16.msra.mxu0 0
    %171 = vmatprep.subr.bf16.mxu0 0
    %172 = vmatpush1.bf16.msra.mxu0 0
    %173 = vmatprep.subr.bf16.mxu0 0
    %174 = vmatpush1.bf16.msra.mxu0 0
    %175 = vmatprep.subr.bf16.mxu0 0
    %176 = vmatpush1.bf16.msra.mxu0 0
    %177 = vmatprep.subr.bf16.mxu0 0
    %178 = vmatpush1.bf16.msra.mxu0 0
    %179 = vmatprep.subr.bf16.mxu0 0
    %180 = vmatpush1.bf16.msra.mxu0 0
    %181 = vmatprep.subr.bf16.mxu0 0
    %182 = vmatpush1.bf16.msra.mxu0 0
    %183 = vmatprep.subr.bf16.mxu0 0
    %184 = vmatpush1.bf16.msra.mxu0 0
    %185 = vmatprep.subr.bf16.mxu0 0
    %186 = vmatpush1.bf16.msra.mxu0 0
    %187 = vmatprep.subr.bf16.mxu0 0
    %188 = vmatpush1.bf16.msra.mxu0 0
    %189 = vmatprep.mubr.bf16.mxu0 0
    %190 = vmatmul.mubr.bf16.gmra.mrb[0].mxu0 %v134
    %v191 = vpop.f32.mrb[0].mxu0
    %v192 = vadd.f32 0.0, %v191
    %v193 = vpop.f32.mrb[0].mxu0
    %v194 = vpop.f32.mrb[0].mxu0
    %v195 = vadd.f32 0.0, %v194
    %v196 = vpop.f32.mrb[0].mxu0
    %197 = vmatprep.mubr.bf16.mxu0 0
    %198 = vmatmul.mubr.bf16.gmra.mrb[0].mxu0 %v137
    %v199 = vpop.f32.mrb[0].mxu0
    %v200 = vadd.f32 0.0, %v199
    %v201 = vpop.f32.mrb[0].mxu0
    %v202 = vpop.f32.mrb[0].mxu0
    %v203 = vadd.f32 0.0, %v202
    %v204 = vpop.f32.mrb[0].mxu0
    %205 = vmatprep.mubr.bf16.mxu0 0
    %206 = vmatmul.mubr.bf16.gmra.mrb[0].mxu0 %v140
    %v207 = vpop.f32.mrb[0].mxu0
    %v208 = vadd.f32 0.0, %v207
    %v209 = vpop.f32.mrb[0].mxu0
    %v210 = vpop.f32.mrb[0].mxu0
    %v211 = vadd.f32 0.0, %v210
    %v212 = vpop.f32.mrb[0].mxu0
    %213 = vmatprep.mubr.bf16.mxu0 0
    %214 = vmatmul.mubr.bf16.gmra.mrb[0].mxu0 %v143
    %v215 = vpop.f32.mrb[0].mxu0
    %v216 = vadd.f32 0.0, %v215
    %v217 = vpop.f32.mrb[0].mxu0
    %v218 = vpop.f32.mrb[0].mxu0
    %v219 = vadd.f32 0.0, %v218
    %v220 = vpop.f32.mrb[0].mxu0
    %221 = vmatprep.mubr.bf16.mxu0 0
    %222 = vmatmul.mubr.bf16.gmra.mrb[0].mxu0 %v146
    %v223 = vpop.f32.mrb[0].mxu0
    %v224 = vadd.f32 0.0, %v223
    %v225 = vpop.f32.mrb[0].mxu0
    %v226 = vpop.f32.mrb[0].mxu0
    %v227 = vadd.f32 0.0, %v226
    %v228 = vpop.f32.mrb[0].mxu0
    %229 = vmatprep.mubr.bf16.mxu0 0
    %230 = vmatmul.mubr.bf16.gmra.mrb[0].mxu0 %v149
    %v231 = vpop.f32.mrb[0].mxu0
    %v232 = vadd.f32 0.0, %v231
    %v233 = vpop.f32.mrb[0].mxu0
    %v234 = vpop.f32.mrb[0].mxu0
    %v235 = vadd.f32 0.0, %v234
    %v236 = vpop.f32.mrb[0].mxu0
    %237 = vmatprep.mubr.bf16.mxu0 0
    %238 = vmatmul.mubr.bf16.gmra.mrb[0].mxu0 %v152
    %v239 = vpop.f32.mrb[0].mxu0
    %v240 = vadd.f32 0.0, %v239
    %v241 = vpop.f32.mrb[0].mxu0
    %v242 = vpop.f32.mrb[0].mxu0
    %v243 = vadd.f32 0.0, %v242
    %v244 = vpop.f32.mrb[0].mxu0
    %245 = vmatprep.mubr.bf16.mxu0 0
    %246 = vmatmul.mubr.bf16.gmra.mrb[0].mxu0 %v155
    %v247 = vpop.f32.mrb[0].mxu0
    %v248 = vadd.f32 0.0, %v247
    %v249 = vpop.f32.mrb[0].mxu0
    %v250 = vpop.f32.mrb[0].mxu0
    %v251 = vadd.f32 0.0, %v250
    %v252 = vpop.f32.mrb[0].mxu0
    %253 = vdwg.mxu0
    %v254 = vlaneseq
    %v255 = vshrl.u32 %v254, 7
    %v256 = vsub.s32 0, %v255
    %v257 = vrot.slane %v98, %v256
    %v258 = vlaneseq
    %v259 = vshrl.u32 %v258, 7
    %v260 = vsub.s32 0, %v259
    %v261 = vrot.slane %v105, %v260
    %v262 = vlaneseq
    %v263 = vshrl.u32 %v262, 7
    %v264 = vsub.s32 0, %v263
    %v265 = vrot.slane %v106, %v264
    %v266 = vlaneseq
    %v267 = vshrl.u32 %v266, 7
    %v268 = vsub.s32 0, %v267
    %v269 = vrot.slane %v107, %v268
    %v274 = vadd.f32 %v192, %v257
    %v275 = vadd.f32 %v195, %v257
    %v276 = vadd.f32 %v200, %v257
    %v277 = vadd.f32 %v203, %v257
    %v278 = vadd.f32 %v208, %v261
    %v279 = vadd.f32 %v211, %v261
    %v280 = vadd.f32 %v216, %v261
    %v281 = vadd.f32 %v219, %v261
    %v282 = vadd.f32 %v224, %v265
    %v283 = vadd.f32 %v227, %v265
    %v284 = vadd.f32 %v232, %v265
    %v285 = vadd.f32 %v235, %v265
    %v286 = vadd.f32 %v240, %v269
    %v287 = vadd.f32 %v243, %v269
    %v288 = vadd.f32 %v248, %v269
    %v289 = vadd.f32 %v251, %v269
    %v290 = vtanh.pop %v274
    %v291 = vtanh.pop %v275
    %v292 = vtanh.pop %v276
    %v293 = vtanh.pop %v277
    %v294 = vtanh.pop %v278
    %v295 = vtanh.pop %v279
    %v296 = vtanh.pop %v280
    %v297 = vtanh.pop %v281
    %v298 = vtanh.pop %v282
    %v299 = vtanh.pop %v283
    %v300 = vtanh.pop %v284
    %v301 = vtanh.pop %v285
    %v302 = vtanh.pop %v286
    %v303 = vtanh.pop %v287
    %v304 = vtanh.pop %v288
    %v305 = vtanh.pop %v289
    %v307 = vlaneseq
    %v308 = vshrl.u32 %v307, 7
    %v309 = vsub.s32 0, %v308
    %v310 = vrot.slane %v108, %v309
    %v312 = vmul.f32 %v290, %v310
    %v313 = vmul.f32 %v291, %v310
    %v314 = vmul.f32 %v292, %v310
    %v315 = vmul.f32 %v293, %v310
    %v316 = vmul.f32 %v294, %v310
    %v317 = vmul.f32 %v295, %v310
    %v318 = vmul.f32 %v296, %v310
    %v319 = vmul.f32 %v297, %v310
    %v320 = vmul.f32 %v298, %v310
    %v321 = vmul.f32 %v299, %v310
    %v322 = vmul.f32 %v300, %v310
    %v323 = vmul.f32 %v301, %v310
    %v324 = vmul.f32 %v302, %v310
    %v325 = vmul.f32 %v303, %v310
    %v326 = vmul.f32 %v304, %v310
    %v327 = vmul.f32 %v305, %v310
    %v328 = vsel %vm39, %v312, 0.0
    %329 = vadd.xlane.f32.xlu0 %v328
    %v330 = vpop.xlane.xlu0 %329
    %v331 = vsel %vm39, %v313, 0.0
    %332 = vadd.xlane.f32.xlu0 %v331
    %v333 = vpop.xlane.xlu0 %332
    %v334 = vsel %vm39, %v314, 0.0
    %335 = vadd.xlane.f32.xlu0 %v334
    %v336 = vpop.xlane.xlu0 %335
    %v337 = vsel %vm39, %v315, 0.0
    %338 = vadd.xlane.f32.xlu0 %v337
    %v339 = vpop.xlane.xlu0 %338
    %v340 = vsel %vm39, %v316, 0.0
    %341 = vadd.xlane.f32.xlu0 %v340
    %v342 = vpop.xlane.xlu0 %341
    %v343 = vsel %vm39, %v317, 0.0
    %344 = vadd.xlane.f32.xlu0 %v343
    %v345 = vpop.xlane.xlu0 %344
    %v346 = vsel %vm39, %v318, 0.0
    %347 = vadd.xlane.f32.xlu0 %v346
    %v348 = vpop.xlane.xlu0 %347
    %v349 = vsel %vm39, %v319, 0.0
    %350 = vadd.xlane.f32.xlu0 %v349
    %v351 = vpop.xlane.xlu0 %350
    %v352 = vsel %vm39, %v320, 0.0
    %353 = vadd.xlane.f32.xlu0 %v352
    %v354 = vpop.xlane.xlu0 %353
    %v355 = vsel %vm39, %v321, 0.0
    %356 = vadd.xlane.f32.xlu0 %v355
    %v357 = vpop.xlane.xlu0 %356
    %v358 = vsel %vm39, %v322, 0.0
    %359 = vadd.xlane.f32.xlu0 %v358
    %v360 = vpop.xlane.xlu0 %359
    %v361 = vsel %vm39, %v323, 0.0
    %362 = vadd.xlane.f32.xlu0 %v361
    %v363 = vpop.xlane.xlu0 %362
    %v364 = vsel %vm39, %v324, 0.0
    %365 = vadd.xlane.f32.xlu0 %v364
    %v366 = vpop.xlane.xlu0 %365
    %v367 = vsel %vm39, %v325, 0.0
    %368 = vadd.xlane.f32.xlu0 %v367
    %v369 = vpop.xlane.xlu0 %368
    %v370 = vsel %vm39, %v326, 0.0
    %371 = vadd.xlane.f32.xlu0 %v370
    %v372 = vpop.xlane.xlu0 %371
    %v373 = vsel %vm39, %v327, 0.0
    %374 = vadd.xlane.f32.xlu0 %v373
    %v375 = vpop.xlane.xlu0 %374
    %v392 = vlaneseq
    %v393 = vand.u32 %v392, 127
    %v394 = vlaneseq
    %v395 = vshrl.u32 %v394, 7
    %v396 = vsub.s32 %v393, %v395
    %v397 = vrot.slane %v330, %v396
    %v398 = vadd.s32 %v393, 4294967288
    %v399 = vlaneseq
    %v400 = vshrl.u32 %v399, 7
    %v401 = vsub.s32 %v398, %v400
    %v402 = vrot.slane %v333, %v401
    %vm403 = vcmask 130112
    %v404 = vsel %vm403, %v402, %v397
    %v405 = vadd.s32 %v393, 4294967280
    %v406 = vlaneseq
    %v407 = vshrl.u32 %v406, 7
    %v408 = vsub.s32 %v405, %v407
    %v409 = vrot.slane %v336, %v408
    %vm410 = vcmask 195712
    %v411 = vsel %vm410, %v409, %v404
    %v412 = vadd.s32 %v393, 4294967272
    %v413 = vlaneseq
    %v414 = vshrl.u32 %v413, 7
    %v415 = vsub.s32 %v412, %v414
    %v416 = vrot.slane %v339, %v415
    %vm417 = vcmask 261312
    %v418 = vsel %vm417, %v416, %v411
    %v419 = vlaneseq
    %v420 = vshrl.u32 %v419, 7
    %v421 = vsub.s32 %v393, %v420
    %v422 = vrot.slane %v342, %v421
    %v423 = vlaneseq
    %v424 = vshrl.u32 %v423, 7
    %v425 = vsub.s32 %v398, %v424
    %v426 = vrot.slane %v345, %v425
    %v427 = vsel %vm403, %v426, %v422
    %v428 = vlaneseq
    %v429 = vshrl.u32 %v428, 7
    %v430 = vsub.s32 %v405, %v429
    %v431 = vrot.slane %v348, %v430
    %v432 = vsel %vm410, %v431, %v427
    %v433 = vlaneseq
    %v434 = vshrl.u32 %v433, 7
    %v435 = vsub.s32 %v412, %v434
    %v436 = vrot.slane %v351, %v435
    %v437 = vsel %vm417, %v436, %v432
    %v438 = vlaneseq
    %v439 = vshrl.u32 %v438, 7
    %v440 = vsub.s32 %v393, %v439
    %v441 = vrot.slane %v354, %v440
    %v442 = vlaneseq
    %v443 = vshrl.u32 %v442, 7
    %v444 = vsub.s32 %v398, %v443
    %v445 = vrot.slane %v357, %v444
    %v446 = vsel %vm403, %v445, %v441
    %v447 = vlaneseq
    %v448 = vshrl.u32 %v447, 7
    %v449 = vsub.s32 %v405, %v448
    %v450 = vrot.slane %v360, %v449
    %v451 = vsel %vm410, %v450, %v446
    %v452 = vlaneseq
    %v453 = vshrl.u32 %v452, 7
    %v454 = vsub.s32 %v412, %v453
    %v455 = vrot.slane %v363, %v454
    %v456 = vsel %vm417, %v455, %v451
    %v457 = vlaneseq
    %v458 = vshrl.u32 %v457, 7
    %v459 = vsub.s32 %v393, %v458
    %v460 = vrot.slane %v366, %v459
    %v461 = vlaneseq
    %v462 = vshrl.u32 %v461, 7
    %v463 = vsub.s32 %v398, %v462
    %v464 = vrot.slane %v369, %v463
    %v465 = vsel %vm403, %v464, %v460
    %v466 = vlaneseq
    %v467 = vshrl.u32 %v466, 7
    %v468 = vsub.s32 %v405, %v467
    %v469 = vrot.slane %v372, %v468
    %v470 = vsel %vm410, %v469, %v465
    %v471 = vlaneseq
    %v472 = vshrl.u32 %v471, 7
    %v473 = vsub.s32 %v412, %v472
    %v474 = vrot.slane %v375, %v473
    %v475 = vsel %vm417, %v474, %v470
    %vm476 = vcmask 1041409
    %v477 = vsel %vm476, %v437, %v418
    %vm478 = vcmask 1042434
    %v479 = vsel %vm478, %v456, %v477
    %vm480 = vcmask 1043459
    %v481 = vsel %vm480, %v475, %v479
    %vm483 = vcmask 257024
    %484 = vst.msk [vmem:[#allocation4] sm:$0xf] %vm483, %v481
    %v485 = vld [vmem:[%s1 + $0x20] sm:$0xff]
    %v486 = vld [vmem:[%s1 + $0x28] sm:$0xff]
    %v487 = vld [vmem:[%s1 + $0x30] sm:$0xff]
    %v488 = vld [vmem:[%s1 + $0x38] sm:$0xff]
    %v489 = vld [vmem:[%s1 + $0x60] sm:$0xff]
    %v490 = vld [vmem:[%s1 + $0x68] sm:$0xff]
    %v491 = vld [vmem:[%s1 + $0x70] sm:$0xff]
    %v492 = vld [vmem:[%s1 + $0x78] sm:$0xff]
    %v493 = vld [vmem:[%s1 + $0xa0] sm:$0xff]
    %v494 = vld [vmem:[%s1 + $0xa8] sm:$0xff]
    %v495 = vld [vmem:[%s1 + $0xb0] sm:$0xff]
    %v496 = vld [vmem:[%s1 + $0xb8] sm:$0xff]
    %v497 = vld [vmem:[%s1 + $0xe0] sm:$0xff]
    %v498 = vld [vmem:[%s1 + $0xe8] sm:$0xff]
    %v499 = vld [vmem:[%s1 + $0xf0] sm:$0xff]
    %v500 = vld [vmem:[%s1 + $0xf8] sm:$0xff]
    %v501 = vpack.c.bf16 %v486, %v485
    %v502 = vpack.c.bf16 %v488, %v487
    %v503 = vpack.c.bf16 %v490, %v489
    %v504 = vpack.c.bf16 %v492, %v491
    %v505 = vpack.c.bf16 %v494, %v493
    %v506 = vpack.c.bf16 %v496, %v495
    %v507 = vpack.c.bf16 %v498, %v497
    %v508 = vpack.c.bf16 %v500, %v499
    %v510 = vsel %vm39, %v501, 0
    %v513 = vsel %vm39, %v502, 0
    %v516 = vsel %vm39, %v503, 0
    %v519 = vsel %vm39, %v504, 0
    %v522 = vsel %vm39, %v505, 0
    %v525 = vsel %vm39, %v506, 0
    %v528 = vsel %vm39, %v507, 0
    %v531 = vsel %vm39, %v508, 0
    %533 = vmatprep.subr.bf16.mxu0 0
    %534 = vmatpush1.bf16.msra.mxu0 %v35
    %535 = vmatprep.subr.bf16.mxu0 0
    %536 = vmatpush1.bf16.msra.mxu0 %v36
    %537 = vmatprep.subr.bf16.mxu0 0
    %538 = vmatpush1.bf16.msra.mxu0 0
    %539 = vmatprep.subr.bf16.mxu0 0
    %540 = vmatpush1.bf16.msra.mxu0 0
    %541 = vmatprep.subr.bf16.mxu0 0
    %542 = vmatpush1.bf16.msra.mxu0 0
    %543 = vmatprep.subr.bf16.mxu0 0
    %544 = vmatpush1.bf16.msra.mxu0 0
    %545 = vmatprep.subr.bf16.mxu0 0
    %546 = vmatpush1.bf16.msra.mxu0 0
    %547 = vmatprep.subr.bf16.mxu0 0
    %548 = vmatpush1.bf16.msra.mxu0 0
    %549 = vmatprep.subr.bf16.mxu0 0
    %550 = vmatpush1.bf16.msra.mxu0 0
    %551 = vmatprep.subr.bf16.mxu0 0
    %552 = vmatpush1.bf16.msra.mxu0 0
    %553 = vmatprep.subr.bf16.mxu0 0
    %554 = vmatpush1.bf16.msra.mxu0 0
    %555 = vmatprep.subr.bf16.mxu0 0
    %556 = vmatpush1.bf16.msra.mxu0 0
    %557 = vmatprep.subr.bf16.mxu0 0
    %558 = vmatpush1.bf16.msra.mxu0 0
    %559 = vmatprep.subr.bf16.mxu0 0
    %560 = vmatpush1.bf16.msra.mxu0 0
    %561 = vmatprep.subr.bf16.mxu0 0
    %562 = vmatpush1.bf16.msra.mxu0 0
    %563 = vmatprep.subr.bf16.mxu0 0
    %564 = vmatpush1.bf16.msra.mxu0 0
    %565 = vmatprep.mubr.bf16.mxu0 0
    %566 = vmatmul.mubr.bf16.gmra.mrb[0].mxu0 %v510
    %v567 = vpop.f32.mrb[0].mxu0
    %v568 = vadd.f32 0.0, %v567
    %v569 = vpop.f32.mrb[0].mxu0
    %v570 = vpop.f32.mrb[0].mxu0
    %v571 = vadd.f32 0.0, %v570
    %v572 = vpop.f32.mrb[0].mxu0
    %573 = vmatprep.mubr.bf16.mxu0 0
    %574 = vmatmul.mubr.bf16.gmra.mrb[0].mxu0 %v513
    %v575 = vpop.f32.mrb[0].mxu0
    %v576 = vadd.f32 0.0, %v575
    %v577 = vpop.f32.mrb[0].mxu0
    %v578 = vpop.f32.mrb[0].mxu0
    %v579 = vadd.f32 0.0, %v578
    %v580 = vpop.f32.mrb[0].mxu0
    %581 = vmatprep.mubr.bf16.mxu0 0
    %582 = vmatmul.mubr.bf16.gmra.mrb[0].mxu0 %v516
    %v583 = vpop.f32.mrb[0].mxu0
    %v584 = vadd.f32 0.0, %v583
    %v585 = vpop.f32.mrb[0].mxu0
    %v586 = vpop.f32.mrb[0].mxu0
    %v587 = vadd.f32 0.0, %v586
    %v588 = vpop.f32.mrb[0].mxu0
    %589 = vmatprep.mubr.bf16.mxu0 0
    %590 = vmatmul.mubr.bf16.gmra.mrb[0].mxu0 %v519
    %v591 = vpop.f32.mrb[0].mxu0
    %v592 = vadd.f32 0.0, %v591
    %v593 = vpop.f32.mrb[0].mxu0
    %v594 = vpop.f32.mrb[0].mxu0
    %v595 = vadd.f32 0.0, %v594
    %v596 = vpop.f32.mrb[0].mxu0
    %597 = vmatprep.mubr.bf16.mxu0 0
    %598 = vmatmul.mubr.bf16.gmra.mrb[0].mxu0 %v522
    %v599 = vpop.f32.mrb[0].mxu0
    %v600 = vadd.f32 0.0, %v599
    %v601 = vpop.f32.mrb[0].mxu0
    %v602 = vpop.f32.mrb[0].mxu0
    %v603 = vadd.f32 0.0, %v602
    %v604 = vpop.f32.mrb[0].mxu0
    %605 = vmatprep.mubr.bf16.mxu0 0
    %606 = vmatmul.mubr.bf16.gmra.mrb[0].mxu0 %v525
    %v607 = vpop.f32.mrb[0].mxu0
    %v608 = vadd.f32 0.0, %v607
    %v609 = vpop.f32.mrb[0].mxu0
    %v610 = vpop.f32.mrb[0].mxu0
    %v611 = vadd.f32 0.0, %v610
    %v612 = vpop.f32.mrb[0].mxu0
    %613 = vmatprep.mubr.bf16.mxu0 0
    %614 = vmatmul.mubr.bf16.gmra.mrb[0].mxu0 %v528
    %v615 = vpop.f32.mrb[0].mxu0
    %v616 = vadd.f32 0.0, %v615
    %v617 = vpop.f32.mrb[0].mxu0
    %v618 = vpop.f32.mrb[0].mxu0
    %v619 = vadd.f32 0.0, %v618
    %v620 = vpop.f32.mrb[0].mxu0
    %621 = vmatprep.mubr.bf16.mxu0 0
    %622 = vmatmul.mubr.bf16.gmra.mrb[0].mxu0 %v531
    %v623 = vpop.f32.mrb[0].mxu0
    %v624 = vadd.f32 0.0, %v623
    %v625 = vpop.f32.mrb[0].mxu0
    %v626 = vpop.f32.mrb[0].mxu0
    %v627 = vadd.f32 0.0, %v626
    %v628 = vpop.f32.mrb[0].mxu0
    %629 = vdwg.mxu0
    %v630 = vadd.f32 %v568, %v257
    %v631 = vadd.f32 %v571, %v257
    %v632 = vadd.f32 %v576, %v257
    %v633 = vadd.f32 %v579, %v257
    %v634 = vadd.f32 %v584, %v261
    %v635 = vadd.f32 %v587, %v261
    %v636 = vadd.f32 %v592, %v261
    %v637 = vadd.f32 %v595, %v261
    %v638 = vadd.f32 %v600, %v265
    %v639 = vadd.f32 %v603, %v265
    %v640 = vadd.f32 %v608, %v265
    %v641 = vadd.f32 %v611, %v265
    %v642 = vadd.f32 %v616, %v269
    %v643 = vadd.f32 %v619, %v269
    %v644 = vadd.f32 %v624, %v269
    %v645 = vadd.f32 %v627, %v269
    %v646 = vtanh.pop %v630
    %v647 = vtanh.pop %v631
    %v648 = vtanh.pop %v632
    %v649 = vtanh.pop %v633
    %v650 = vtanh.pop %v634
    %v651 = vtanh.pop %v635
    %v652 = vtanh.pop %v636
    %v653 = vtanh.pop %v637
    %v654 = vtanh.pop %v638
    %v655 = vtanh.pop %v639
    %v656 = vtanh.pop %v640
    %v657 = vtanh.pop %v641
    %v658 = vtanh.pop %v642
    %v659 = vtanh.pop %v643
    %v660 = vtanh.pop %v644
    %v661 = vtanh.pop %v645
    %v662 = vmul.f32 %v646, %v310
    %v663 = vmul.f32 %v647, %v310
    %v664 = vmul.f32 %v648, %v310
    %v665 = vmul.f32 %v649, %v310
    %v666 = vmul.f32 %v650, %v310
    %v667 = vmul.f32 %v651, %v310
    %v668 = vmul.f32 %v652, %v310
    %v669 = vmul.f32 %v653, %v310
    %v670 = vmul.f32 %v654, %v310
    %v671 = vmul.f32 %v655, %v310
    %v672 = vmul.f32 %v656, %v310
    %v673 = vmul.f32 %v657, %v310
    %v674 = vmul.f32 %v658, %v310
    %v675 = vmul.f32 %v659, %v310
    %v676 = vmul.f32 %v660, %v310
    %v677 = vmul.f32 %v661, %v310
    %v678 = vsel %vm39, %v662, 0.0
    %679 = vadd.xlane.f32.xlu0 %v678
    %v680 = vpop.xlane.xlu0 %679
    %v681 = vsel %vm39, %v663, 0.0
    %682 = vadd.xlane.f32.xlu0 %v681
    %v683 = vpop.xlane.xlu0 %682
    %v684 = vsel %vm39, %v664, 0.0
    %685 = vadd.xlane.f32.xlu0 %v684
    %v686 = vpop.xlane.xlu0 %685
    %v687 = vsel %vm39, %v665, 0.0
    %688 = vadd.xlane.f32.xlu0 %v687
    %v689 = vpop.xlane.xlu0 %688
    %v690 = vsel %vm39, %v666, 0.0
    %691 = vadd.xlane.f32.xlu0 %v690
    %v692 = vpop.xlane.xlu0 %691
    %v693 = vsel %vm39, %v667, 0.0
    %694 = vadd.xlane.f32.xlu0 %v693
    %v695 = vpop.xlane.xlu0 %694
    %v696 = vsel %vm39, %v668, 0.0
    %697 = vadd.xlane.f32.xlu0 %v696
    %v698 = vpop.xlane.xlu0 %697
    %v699 = vsel %vm39, %v669, 0.0
    %700 = vadd.xlane.f32.xlu0 %v699
    %v701 = vpop.xlane.xlu0 %700
    %v702 = vsel %vm39, %v670, 0.0
    %703 = vadd.xlane.f32.xlu0 %v702
    %v704 = vpop.xlane.xlu0 %703
    %v705 = vsel %vm39, %v671, 0.0
    %706 = vadd.xlane.f32.xlu0 %v705
    %v707 = vpop.xlane.xlu0 %706
    %v708 = vsel %vm39, %v672, 0.0
    %709 = vadd.xlane.f32.xlu0 %v708
    %v710 = vpop.xlane.xlu0 %709
    %v711 = vsel %vm39, %v673, 0.0
    %712 = vadd.xlane.f32.xlu0 %v711
    %v713 = vpop.xlane.xlu0 %712
    %v714 = vsel %vm39, %v674, 0.0
    %715 = vadd.xlane.f32.xlu0 %v714
    %v716 = vpop.xlane.xlu0 %715
    %v717 = vsel %vm39, %v675, 0.0
    %718 = vadd.xlane.f32.xlu0 %v717
    %v719 = vpop.xlane.xlu0 %718
    %v720 = vsel %vm39, %v676, 0.0
    %721 = vadd.xlane.f32.xlu0 %v720
    %v722 = vpop.xlane.xlu0 %721
    %v723 = vsel %vm39, %v677, 0.0
    %724 = vadd.xlane.f32.xlu0 %v723
    %v725 = vpop.xlane.xlu0 %724
    %v742 = vadd.s32 %v393, 4294967264
    %v743 = vlaneseq
    %v744 = vshrl.u32 %v743, 7
    %v745 = vsub.s32 %v742, %v744
    %v746 = vrot.slane %v680, %v745
    %v747 = vadd.s32 %v393, 4294967256
    %v748 = vlaneseq
    %v749 = vshrl.u32 %v748, 7
    %v750 = vsub.s32 %v747, %v749
    %v751 = vrot.slane %v683, %v750
    %vm752 = vcmask 392512
    %v753 = vsel %vm752, %v751, %v746
    %v754 = vadd.s32 %v393, 4294967248
    %v755 = vlaneseq
    %v756 = vshrl.u32 %v755, 7
    %v757 = vsub.s32 %v754, %v756
    %v758 = vrot.slane %v686, %v757
    %vm759 = vcmask 458112
    %v760 = vsel %vm759, %v758, %v753
    %v761 = vadd.s32 %v393, 4294967240
    %v762 = vlaneseq
    %v763 = vshrl.u32 %v762, 7
    %v764 = vsub.s32 %v761, %v763
    %v765 = vrot.slane %v689, %v764
    %vm766 = vcmask 523712
    %v767 = vsel %vm766, %v765, %v760
    %v768 = vlaneseq
    %v769 = vshrl.u32 %v768, 7
    %v770 = vsub.s32 %v742, %v769
    %v771 = vrot.slane %v692, %v770
    %v772 = vlaneseq
    %v773 = vshrl.u32 %v772, 7
    %v774 = vsub.s32 %v747, %v773
    %v775 = vrot.slane %v695, %v774
    %v776 = vsel %vm752, %v775, %v771
    %v777 = vlaneseq
    %v778 = vshrl.u32 %v777, 7
    %v779 = vsub.s32 %v754, %v778
    %v780 = vrot.slane %v698, %v779
    %v781 = vsel %vm759, %v780, %v776
    %v782 = vlaneseq
    %v783 = vshrl.u32 %v782, 7
    %v784 = vsub.s32 %v761, %v783
    %v785 = vrot.slane %v701, %v784
    %v786 = vsel %vm766, %v785, %v781
    %v787 = vlaneseq
    %v788 = vshrl.u32 %v787, 7
    %v789 = vsub.s32 %v742, %v788
    %v790 = vrot.slane %v704, %v789
    %v791 = vlaneseq
    %v792 = vshrl.u32 %v791, 7
    %v793 = vsub.s32 %v747, %v792
    %v794 = vrot.slane %v707, %v793
    %v795 = vsel %vm752, %v794, %v790
    %v796 = vlaneseq
    %v797 = vshrl.u32 %v796, 7
    %v798 = vsub.s32 %v754, %v797
    %v799 = vrot.slane %v710, %v798
    %v800 = vsel %vm759, %v799, %v795
    %v801 = vlaneseq
    %v802 = vshrl.u32 %v801, 7
    %v803 = vsub.s32 %v761, %v802
    %v804 = vrot.slane %v713, %v803
    %v805 = vsel %vm766, %v804, %v800
    %v806 = vlaneseq
    %v807 = vshrl.u32 %v806, 7
    %v808 = vsub.s32 %v742, %v807
    %v809 = vrot.slane %v716, %v808
    %v810 = vlaneseq
    %v811 = vshrl.u32 %v810, 7
    %v812 = vsub.s32 %v747, %v811
    %v813 = vrot.slane %v719, %v812
    %v814 = vsel %vm752, %v813, %v809
    %v815 = vlaneseq
    %v816 = vshrl.u32 %v815, 7
    %v817 = vsub.s32 %v754, %v816
    %v818 = vrot.slane %v722, %v817
    %v819 = vsel %vm759, %v818, %v814
    %v820 = vlaneseq
    %v821 = vshrl.u32 %v820, 7
    %v822 = vsub.s32 %v761, %v821
    %v823 = vrot.slane %v725, %v822
    %v824 = vsel %vm766, %v823, %v819
    %v825 = vsel %vm476, %v786, %v767
    %v826 = vsel %vm478, %v805, %v825
    %v827 = vsel %vm480, %v824, %v826
    %vm829 = vcmask 519424
    %830 = vst.msk [vmem:[#allocation4] sm:$0xf] %vm829, %v827
    %v831 = vld [vmem:[#allocation4] sm:$0xf]
    %vm832 = vcmask 519168
    %v833 = vsel %vm832, %v831, -inf
    %834 = vmax.xlane.f32.xlu0 %v833
    %v835 = vpop.xlane.xlu0 %834
    %v836 = vsub.f32 %v831, %v835
    %v837 = vmul.f32 %v836, 1.442695
    %v838 = vpow.pop %v837
    %v839 = vsel %vm832, %v838, 0.0
    %840 = vadd.xlane.f32.xlu0 %v839
    %v841 = vpop.xlane.xlu0 %840
    %v842 = vrcp.pop %v841
    %v843 = vmul.f32 %v838, %v842
    %844 = vst.msk [vmem:[#allocation4] sm:$0xf] %vm832, %v843
    %v845 = vld [vmem:[%s1] sm:$0xff]
    %v846 = vld [vmem:[%s1 + $0x8] sm:$0xff]
    %v847 = vld [vmem:[%s1 + $0x10] sm:$0xff]
    %v848 = vld [vmem:[%s1 + $0x18] sm:$0xff]
    %v849 = vld [vmem:[%s1 + $0x40] sm:$0xff]
    %v850 = vld [vmem:[%s1 + $0x48] sm:$0xff]
    %v851 = vld [vmem:[%s1 + $0x50] sm:$0xff]
    %v852 = vld [vmem:[%s1 + $0x58] sm:$0xff]
    %v853 = vld [vmem:[%s1 + $0x80] sm:$0xff]
    %v854 = vld [vmem:[%s1 + $0x88] sm:$0xff]
    %v855 = vld [vmem:[%s1 + $0x90] sm:$0xff]
    %v856 = vld [vmem:[%s1 + $0x98] sm:$0xff]
    %v857 = vld [vmem:[%s1 + $0xc0] sm:$0xff]
    %v858 = vld [vmem:[%s1 + $0xc8] sm:$0xff]
    %v859 = vld [vmem:[%s1 + $0xd0] sm:$0xff]
    %v860 = vld [vmem:[%s1 + $0xd8] sm:$0xff]
    %v861 = vlaneseq
    %v862 = vshrl.u32 %v861, 7
    %v863 = vsub.s32 0, %v862
    %v864 = vrot.slane %v843, %v863
    %866 = vbcast.lane.b32.xlu0 %v864, 256
    %v867 = vpop.permute.xlu0 %866
    %s869 = sor.u32 256, 8
    %870 = vbcast.lane.b32.xlu0 %v864, %s869
    %v871 = vpop.permute.xlu0 %870
    %s873 = sor.u32 256, 16
    %874 = vbcast.lane.b32.xlu0 %v864, %s873
    %v875 = vpop.permute.xlu0 %874
    %s877 = sor.u32 256, 24
    %878 = vbcast.lane.b32.xlu0 %v864, %s877
    %v879 = vpop.permute.xlu0 %878
    %v880 = vlaneseq
    %v881 = vshrl.u32 %v880, 7
    %v882 = vsub.s32 1, %v881
    %v883 = vrot.slane %v843, %v882
    %885 = vbcast.lane.b32.xlu0 %v883, 256
    %v886 = vpop.permute.xlu0 %885
    %s888 = sor.u32 256, 8
    %889 = vbcast.lane.b32.xlu0 %v883, %s888
    %v890 = vpop.permute.xlu0 %889
    %s892 = sor.u32 256, 16
    %893 = vbcast.lane.b32.xlu0 %v883, %s892
    %v894 = vpop.permute.xlu0 %893
    %s896 = sor.u32 256, 24
    %897 = vbcast.lane.b32.xlu0 %v883, %s896
    %v898 = vpop.permute.xlu0 %897
    %v899 = vlaneseq
    %v900 = vshrl.u32 %v899, 7
    %v901 = vsub.s32 2, %v900
    %v902 = vrot.slane %v843, %v901
    %904 = vbcast.lane.b32.xlu0 %v902, 256
    %v905 = vpop.permute.xlu0 %904
    %s907 = sor.u32 256, 8
    %908 = vbcast.lane.b32.xlu0 %v902, %s907
    %v909 = vpop.permute.xlu0 %908
    %s911 = sor.u32 256, 16
    %912 = vbcast.lane.b32.xlu0 %v902, %s911
    %v913 = vpop.permute.xlu0 %912
    %s915 = sor.u32 256, 24
    %916 = vbcast.lane.b32.xlu0 %v902, %s915
    %v917 = vpop.permute.xlu0 %916
    %v918 = vlaneseq
    %v919 = vshrl.u32 %v918, 7
    %v920 = vsub.s32 3, %v919
    %v921 = vrot.slane %v843, %v920
    %923 = vbcast.lane.b32.xlu0 %v921, 256
    %v924 = vpop.permute.xlu0 %923
    %s926 = sor.u32 256, 8
    %927 = vbcast.lane.b32.xlu0 %v921, %s926
    %v928 = vpop.permute.xlu0 %927
    %s930 = sor.u32 256, 16
    %931 = vbcast.lane.b32.xlu0 %v921, %s930
    %v932 = vpop.permute.xlu0 %931
    %s934 = sor.u32 256, 24
    %935 = vbcast.lane.b32.xlu0 %v921, %s934
    %v936 = vpop.permute.xlu0 %935
    %v937 = vmul.f32 %v867, %v845
    %v938 = vmul.f32 %v871, %v846
    %v939 = vmul.f32 %v875, %v847
    %v940 = vmul.f32 %v879, %v848
    %v941 = vmul.f32 %v886, %v849
    %v942 = vmul.f32 %v890, %v850
    %v943 = vmul.f32 %v894, %v851
    %v944 = vmul.f32 %v898, %v852
    %v945 = vmul.f32 %v905, %v853
    %v946 = vmul.f32 %v909, %v854
    %v947 = vmul.f32 %v913, %v855
    %v948 = vmul.f32 %v917, %v856
    %v949 = vmul.f32 %v924, %v857
    %v950 = vmul.f32 %v928, %v858
    %v951 = vmul.f32 %v932, %v859
    %v952 = vmul.f32 %v936, %v860
    %v953 = vsel %vm39, %v937, 0.0
    %v954 = vsel %vm39, %v938, 0.0
    %v955 = vadd.f32 %v953, %v954
    %v956 = vsel %vm39, %v939, 0.0
    %v957 = vadd.f32 %v955, %v956
    %v958 = vsel %vm39, %v940, 0.0
    %v959 = vadd.f32 %v957, %v958
    %v960 = vrot.slane %v959, 4
    %v961 = vadd.f32 %v959, %v960
    %v962 = vrot.slane %v961, 2
    %v963 = vadd.f32 %v961, %v962
    %v964 = vrot.slane %v963, 1
    %v965 = vadd.f32 %v963, %v964
    %v966 = vsel %vm39, %v941, 0.0
    %v967 = vsel %vm39, %v942, 0.0
    %v968 = vadd.f32 %v966, %v967
    %v969 = vsel %vm39, %v943, 0.0
    %v970 = vadd.f32 %v968, %v969
    %v971 = vsel %vm39, %v944, 0.0
    %v972 = vadd.f32 %v970, %v971
    %v973 = vrot.slane %v972, 4
    %v974 = vadd.f32 %v972, %v973
    %v975 = vrot.slane %v974, 2
    %v976 = vadd.f32 %v974, %v975
    %v977 = vrot.slane %v976, 1
    %v978 = vadd.f32 %v976, %v977
    %v979 = vsel %vm39, %v945, 0.0
    %v980 = vsel %vm39, %v946, 0.0
    %v981 = vadd.f32 %v979, %v980
    %v982 = vsel %vm39, %v947, 0.0
    %v983 = vadd.f32 %v981, %v982
    %v984 = vsel %vm39, %v948, 0.0
    %v985 = vadd.f32 %v983, %v984
    %v986 = vrot.slane %v985, 4
    %v987 = vadd.f32 %v985, %v986
    %v988 = vrot.slane %v987, 2
    %v989 = vadd.f32 %v987, %v988
    %v990 = vrot.slane %v989, 1
    %v991 = vadd.f32 %v989, %v990
    %v992 = vsel %vm39, %v949, 0.0
    %v993 = vsel %vm39, %v950, 0.0
    %v994 = vadd.f32 %v992, %v993
    %v995 = vsel %vm39, %v951, 0.0
    %v996 = vadd.f32 %v994, %v995
    %v997 = vsel %vm39, %v952, 0.0
    %v998 = vadd.f32 %v996, %v997
    %v999 = vrot.slane %v998, 4
    %v1000 = vadd.f32 %v998, %v999
    %v1001 = vrot.slane %v1000, 2
    %v1002 = vadd.f32 %v1000, %v1001
    %v1003 = vrot.slane %v1002, 1
    %v1004 = vadd.f32 %v1002, %v1003
    %v1005 = vadd.f32 %v965, 0.0
    %v1006 = vadd.f32 %v978, 0.0
    %v1007 = vadd.f32 %v991, 0.0
    %v1008 = vadd.f32 %v1004, 0.0
    %v1009 = vld [vmem:[%s1 + $0x20] sm:$0xff]
    %v1010 = vld [vmem:[%s1 + $0x28] sm:$0xff]
    %v1011 = vld [vmem:[%s1 + $0x30] sm:$0xff]
    %v1012 = vld [vmem:[%s1 + $0x38] sm:$0xff]
    %v1013 = vld [vmem:[%s1 + $0x60] sm:$0xff]
    %v1014 = vld [vmem:[%s1 + $0x68] sm:$0xff]
    %v1015 = vld [vmem:[%s1 + $0x70] sm:$0xff]
    %v1016 = vld [vmem:[%s1 + $0x78] sm:$0xff]
    %v1017 = vld [vmem:[%s1 + $0xa0] sm:$0xff]
    %v1018 = vld [vmem:[%s1 + $0xa8] sm:$0xff]
    %v1019 = vld [vmem:[%s1 + $0xb0] sm:$0xff]
    %v1020 = vld [vmem:[%s1 + $0xb8] sm:$0xff]
    %v1021 = vld [vmem:[%s1 + $0xe0] sm:$0xff]
    %v1022 = vld [vmem:[%s1 + $0xe8] sm:$0xff]
    %v1023 = vld [vmem:[%s1 + $0xf0] sm:$0xff]
    %v1024 = vld [vmem:[%s1 + $0xf8] sm:$0xff]
    %s1026 = sor.u32 256, 32
    %1027 = vbcast.lane.b32.xlu0 %v864, %s1026
    %v1028 = vpop.permute.xlu0 %1027
    %s1030 = sor.u32 256, 40
    %1031 = vbcast.lane.b32.xlu0 %v864, %s1030
    %v1032 = vpop.permute.xlu0 %1031
    %s1034 = sor.u32 256, 48
    %1035 = vbcast.lane.b32.xlu0 %v864, %s1034
    %v1036 = vpop.permute.xlu0 %1035
    %s1038 = sor.u32 256, 56
    %1039 = vbcast.lane.b32.xlu0 %v864, %s1038
    %v1040 = vpop.permute.xlu0 %1039
    %s1042 = sor.u32 256, 32
    %1043 = vbcast.lane.b32.xlu0 %v883, %s1042
    %v1044 = vpop.permute.xlu0 %1043
    %s1046 = sor.u32 256, 40
    %1047 = vbcast.lane.b32.xlu0 %v883, %s1046
    %v1048 = vpop.permute.xlu0 %1047
    %s1050 = sor.u32 256, 48
    %1051 = vbcast.lane.b32.xlu0 %v883, %s1050
    %v1052 = vpop.permute.xlu0 %1051
    %s1054 = sor.u32 256, 56
    %1055 = vbcast.lane.b32.xlu0 %v883, %s1054
    %v1056 = vpop.permute.xlu0 %1055
    %s1058 = sor.u32 256, 32
    %1059 = vbcast.lane.b32.xlu0 %v902, %s1058
    %v1060 = vpop.permute.xlu0 %1059
    %s1062 = sor.u32 256, 40
    %1063 = vbcast.lane.b32.xlu0 %v902, %s1062
    %v1064 = vpop.permute.xlu0 %1063
    %s1066 = sor.u32 256, 48
    %1067 = vbcast.lane.b32.xlu0 %v902, %s1066
    %v1068 = vpop.permute.xlu0 %1067
    %s1070 = sor.u32 256, 56
    %1071 = vbcast.lane.b32.xlu0 %v902, %s1070
    %v1072 = vpop.permute.xlu0 %1071
    %s1074 = sor.u32 256, 32
    %1075 = vbcast.lane.b32.xlu0 %v921, %s1074
    %v1076 = vpop.permute.xlu0 %1075
    %s1078 = sor.u32 256, 40
    %1079 = vbcast.lane.b32.xlu0 %v921, %s1078
    %v1080 = vpop.permute.xlu0 %1079
    %s1082 = sor.u32 256, 48
    %1083 = vbcast.lane.b32.xlu0 %v921, %s1082
    %v1084 = vpop.permute.xlu0 %1083
    %s1086 = sor.u32 256, 56
    %1087 = vbcast.lane.b32.xlu0 %v921, %s1086
    %v1088 = vpop.permute.xlu0 %1087
    %v1089 = vmul.f32 %v1028, %v1009
    %v1090 = vmul.f32 %v1032, %v1010
    %v1091 = vmul.f32 %v1036, %v1011
    %v1092 = vmul.f32 %v1040, %v1012
    %v1093 = vmul.f32 %v1044, %v1013
    %v1094 = vmul.f32 %v1048, %v1014
    %v1095 = vmul.f32 %v1052, %v1015
    %v1096 = vmul.f32 %v1056, %v1016
    %v1097 = vmul.f32 %v1060, %v1017
    %v1098 = vmul.f32 %v1064, %v1018
    %v1099 = vmul.f32 %v1068, %v1019
    %v1100 = vmul.f32 %v1072, %v1020
    %v1101 = vmul.f32 %v1076, %v1021
    %v1102 = vmul.f32 %v1080, %v1022
    %v1103 = vmul.f32 %v1084, %v1023
    %v1104 = vmul.f32 %v1088, %v1024
    %v1105 = vsel %vm39, %v1089, 0.0
    %v1106 = vsel %vm39, %v1090, 0.0
    %v1107 = vadd.f32 %v1105, %v1106
    %v1108 = vsel %vm39, %v1091, 0.0
    %v1109 = vadd.f32 %v1107, %v1108
    %v1110 = vsel %vm39, %v1092, 0.0
    %v1111 = vadd.f32 %v1109, %v1110
    %v1112 = vrot.slane %v1111, 4
    %v1113 = vadd.f32 %v1111, %v1112
    %v1114 = vrot.slane %v1113, 2
    %v1115 = vadd.f32 %v1113, %v1114
    %v1116 = vrot.slane %v1115, 1
    %v1117 = vadd.f32 %v1115, %v1116
    %v1118 = vsel %vm39, %v1093, 0.0
    %v1119 = vsel %vm39, %v1094, 0.0
    %v1120 = vadd.f32 %v1118, %v1119
    %v1121 = vsel %vm39, %v1095, 0.0
    %v1122 = vadd.f32 %v1120, %v1121
    %v1123 = vsel %vm39, %v1096, 0.0
    %v1124 = vadd.f32 %v1122, %v1123
    %v1125 = vrot.slane %v1124, 4
    %v1126 = vadd.f32 %v1124, %v1125
    %v1127 = vrot.slane %v1126, 2
    %v1128 = vadd.f32 %v1126, %v1127
    %v1129 = vrot.slane %v1128, 1
    %v1130 = vadd.f32 %v1128, %v1129
    %v1131 = vsel %vm39, %v1097, 0.0
    %v1132 = vsel %vm39, %v1098, 0.0
    %v1133 = vadd.f32 %v1131, %v1132
    %v1134 = vsel %vm39, %v1099, 0.0
    %v1135 = vadd.f32 %v1133, %v1134
    %v1136 = vsel %vm39, %v1100, 0.0
    %v1137 = vadd.f32 %v1135, %v1136
    %v1138 = vrot.slane %v1137, 4
    %v1139 = vadd.f32 %v1137, %v1138
    %v1140 = vrot.slane %v1139, 2
    %v1141 = vadd.f32 %v1139, %v1140
    %v1142 = vrot.slane %v1141, 1
    %v1143 = vadd.f32 %v1141, %v1142
    %v1144 = vsel %vm39, %v1101, 0.0
    %v1145 = vsel %vm39, %v1102, 0.0
    %v1146 = vadd.f32 %v1144, %v1145
    %v1147 = vsel %vm39, %v1103, 0.0
    %v1148 = vadd.f32 %v1146, %v1147
    %v1149 = vsel %vm39, %v1104, 0.0
    %v1150 = vadd.f32 %v1148, %v1149
    %v1151 = vrot.slane %v1150, 4
    %v1152 = vadd.f32 %v1150, %v1151
    %v1153 = vrot.slane %v1152, 2
    %v1154 = vadd.f32 %v1152, %v1153
    %v1155 = vrot.slane %v1154, 1
    %v1156 = vadd.f32 %v1154, %v1155
    %v1157 = vadd.f32 %v1005, %v1117
    %v1158 = vadd.f32 %v1006, %v1130
    %v1159 = vadd.f32 %v1007, %v1143
    %v1160 = vadd.f32 %v1008, %v1156
    %v1165 = vsel %vm476, %v1158, %v1157
    %v1166 = vsel %vm478, %v1159, %v1165
    %v1167 = vsel %vm480, %v1160, %v1166
    %1169 = vst.msk [vmem:[#allocation2] sm:$0xf] %vm483, %v1167
    // Predicated region
    $region22: #{tpu_custom_call.1} parent=1 // pred_check
      _
    $region23: #{tpu_custom_call.1} parent=1 // pred_check_branch
      %1171 = sbr.rel (0) target = $region25
    $region24: #{tpu_custom_call.1} parent=1 // pred_region
      %s1173 = ssub.s32 64, 64
      %1174 = vsyncadd [#allocation3], %s1173
      %s1176 = sshll.u32 [#allocation2], 4
      %s1177 = int_to_ptr.vmem [resolvable:$true] %s1176
      %1179 = dma.vmem_to_hbm [thread:$0]  %s1177, 64, %s5, [#allocation3]
    $region25: #{tpu_custom_call.1} parent=1 // pred_fallthru
      _
    // Predicated region
    $region26: #{tpu_custom_call.1} parent=1 // pred_check
      _
    $region27: #{tpu_custom_call.1} parent=1 // pred_check_branch
      %1181 = sbr.rel (0) target = $region29
    $region28: #{tpu_custom_call.1} parent=1 // pred_region
      %s1183 = ssub.s32 64, 64
      %1184 = vsyncadd [#allocation5], %s1183
      %s1186 = sshll.u32 [#allocation4], 4
      %s1187 = int_to_ptr.vmem [resolvable:$true] %s1186
      %1189 = dma.vmem_to_hbm [thread:$0]  %s1187, 64, %s6, [#allocation5]
    $region29: #{tpu_custom_call.1} parent=1 // pred_fallthru
      _
    // Predicated region
    $region30: #{tpu_custom_call.1} parent=1 // pred_check
      _
    $region31: #{tpu_custom_call.1} parent=1 // pred_check_branch
      %1191 = sbr.rel (0) target = $region33
    $region32: #{tpu_custom_call.1} parent=1 // pred_region
      %1192 = dma.done [#allocation3], 64
    $region33: #{tpu_custom_call.1} parent=1 // pred_fallthru
      _
    // Predicated region
    $region34: #{tpu_custom_call.1} parent=1 // pred_check
      _
    $region35: #{tpu_custom_call.1} parent=1 // pred_check_branch
      %1194 = sbr.rel (0) target = $region37
    $region36: #{tpu_custom_call.1} parent=1 // pred_region
      %1195 = dma.done [#allocation5], 64
    $region37: #{tpu_custom_call.1} parent=1 // pred_fallthru
      _
    %1196 = vsyncpa [#allocation3], 1
    %1197 = vsyncpa [#allocation5], 1

</llo_original>
